<compile_context>
chip_gen: v7x
topology: tpu7x:2x2x1
jax: 0.10.0
libtpu: 0.0.40
codegen_flags: <defaults>
</compile_context>

<pallas_src>
import functools

import jax
import jax.numpy as jnp
from jax.experimental import pallas as pl
from jax.experimental.pallas import tpu as pltpu


def _round_up(x, m):
    return ((x + m - 1) // m) * m


def _lsr_kernel(x_ref, lab_ref, out_ref, *, n_classes, batch, block_b, steps,
                coef_true, coef_off):
    """Processes one (C, block_b) batch tile; accumulates a partial loss sum."""
    s = pl.program_id(0)          # parallel batch-split axis (megacore on v7x)
    i = pl.program_id(1)          # "arbitrary" accumulation axis within a split

    @pl.when(i == 0)
    def _():
        out_ref[0, 0] = jnp.float32(0.0)

    x = x_ref[...].astype(jnp.float32)        # (C, block_b), classes on sublanes
    labels = lab_ref[...]                     # (1, block_b) int32

    # Numerically-stable log-softmax pieces along the class (sublane) axis.
    m = jnp.max(x, axis=0, keepdims=True)                        # (1, block_b)
    z = x - m
    lse = jnp.log(jnp.sum(jnp.exp(z), axis=0, keepdims=True))    # (1, block_b)

    # Isolate z at the true class with a single masked sublane reduce.
    row_ids = jax.lax.broadcasted_iota(jnp.int32, x.shape, 0)
    z_true = jnp.sum(jnp.where(row_ids == labels, z, 0.0),
                     axis=0, keepdims=True)                      # (1, block_b)
    logp_true = z_true - lse
    sum_logp = jnp.sum(z, axis=0, keepdims=True) - jnp.float32(n_classes) * lse

    per_sample = -(jnp.float32(coef_true) * logp_true
                   + jnp.float32(coef_off) * sum_logp)           # (1, block_b)

    # Mask out padded batch columns (global column index >= real batch size).
    col0 = (s * steps + i) * block_b
    col = col0 + jax.lax.broadcasted_iota(jnp.int32, (1, block_b), 1)
    per_sample = jnp.where(col < batch, per_sample, 0.0)

    out_ref[0, 0] += jnp.sum(per_sample)


def lsr_loss(outputs, labels, n_classes=7, eps=0.1, *, block_b=8192,
             num_splits=2):
    """outputs: (B, C) float logits; labels: (B,) int class indices."""
    B, C = outputs.shape
    assert labels.shape[0] == B
    assert n_classes == C, "n_classes must match the logits' class dimension"

    # Lane-dense batch tiling: batch lives on the 128-lane axis.
    tb = min(_round_up(block_b, 128), _round_up(B, 128))
    n_blocks = pl.cdiv(B, tb)
    n_splits = max(1, min(num_splits, n_blocks))
    steps = pl.cdiv(n_blocks, n_splits)
    b_pad = n_splits * steps * tb

    # Wrapper-side layout plumbing: transpose + pad to a lane-dense slab.
    x_t = jnp.pad(outputs.astype(jnp.float32).T, ((0, 0), (0, b_pad - B)))
    lab = jnp.pad(labels.astype(jnp.int32).reshape(1, B),
                  ((0, 0), (0, b_pad - B)))

    # Precompute smoothing coefficients / 1/B as Python floats.
    coef_off = float(eps) / (n_classes - 1)
    coef_true = 1.0 - float(eps) - coef_off

    kernel = functools.partial(
        _lsr_kernel, n_classes=C, batch=B, block_b=tb, steps=steps,
        coef_true=coef_true, coef_off=coef_off)

    partials = pl.pallas_call(
        kernel,
        out_shape=jax.ShapeDtypeStruct((n_splits, 1), jnp.float32),
        grid=(n_splits, steps),
        in_specs=[
            pl.BlockSpec((C, tb), lambda s, i: (0, s * steps + i)),
            pl.BlockSpec((1, tb), lambda s, i: (0, s * steps + i)),
        ],
        out_specs=pl.BlockSpec((1, 1), lambda s, i: (s, 0),
                               memory_space=pltpu.SMEM),
        compiler_params=pltpu.CompilerParams(
            dimension_semantics=("parallel", "arbitrary"),
            vmem_limit_bytes=32 * 1024 * 1024),
    )(x_t, lab)

    return jnp.sum(partials) * jnp.float32(1.0 / B)


def lsr_ref(outputs, labels, n_classes=7, eps=0.1):
    one_hot = jax.nn.one_hot(labels, n_classes, dtype=jnp.float32)
    smooth = jnp.where(one_hot > 0, 1.0 - eps, eps / (n_classes - 1))
    logsm = jax.nn.log_softmax(outputs, axis=1)
    return jnp.mean(jnp.sum(-smooth * logsm, axis=1))


if __name__ == "__main__":
    key = jax.random.PRNGKey(0)
    k1, k2, k3, k4 = jax.random.split(key, 4)

    # Small case matching the module defaults (n_classes = 7).
    B, C = 8, 7
    outputs = jax.random.normal(k1, (B, C), dtype=jnp.float32)
    labels = jax.random.randint(k2, (B,), 0, C, dtype=jnp.int32)

    loss = lsr_loss(outputs, labels, n_classes=C, eps=0.1)
    jax.block_until_ready(loss)
    ref = lsr_ref(outputs, labels, n_classes=C, eps=0.1)
    assert jnp.allclose(loss, ref, atol=1e-5, rtol=1e-5), (loss, ref)

    # Larger batch with small block_b to exercise the tiled, multi-split,
    # masked-padding accumulation path.
    B2 = 300
    outputs2 = jax.random.normal(k3, (B2, C), dtype=jnp.float32)
    labels2 = jax.random.randint(k4, (B2,), 0, C, dtype=jnp.int32)

    loss2 = lsr_loss(outputs2, labels2, n_classes=C, eps=0.1, block_b=128)
    jax.block_until_ready(loss2)
    ref2 = lsr_ref(outputs2, labels2, n_classes=C, eps=0.1)
    assert jnp.allclose(loss2, ref2, atol=1e-5, rtol=1e-5), (loss2, ref2)

    print("KERNEL_OK")
</pallas_src>

<mosaic_0001>
module attributes {stable_mosaic.version = 11 : i64} {
  func.func @_lsr_kernel(%arg0: i32, %arg1: i32, %arg2: memref<7x128xf32, #tpu.memory_space<vmem>>, %arg3: memref<1x128xi32, #tpu.memory_space<vmem>>, %arg4: memref<1x1xf32, #tpu.memory_space<smem>>) attributes {dimension_semantics = [#tpu.dimension_semantics<parallel>, #tpu.dimension_semantics<arbitrary>], iteration_bounds = array<i64: 1, 1>, scalar_prefetch = 0 : i64, scratch_operands = 0 : i64, tpu.core_type = #tpu.core_type<tc>, window_params = [{transform_indices = @transform_0, window_bounds = array<i64: 7, 128>}, {transform_indices = @transform_1, window_bounds = array<i64: 1, 128>}, {transform_indices = @transform_2, window_bounds = array<i64: 1, 1>}]} {
    %c0_i32 = arith.constant 0 : i32
    %0 = arith.cmpi eq, %arg1, %c0_i32 : i32
    %1 = arith.extui %0 : i1 to i32
    %c0_i32_0 = arith.constant 0 : i32
    %2 = arith.cmpi ne, %1, %c0_i32_0 : i32
    scf.if %2 {
      %cst_18 = arith.constant 0.000000e+00 : f32
      %c0_19 = arith.constant 0 : index
      %c0_20 = arith.constant 0 : index
      %50 = memref.load %arg4[%c0_19, %c0_20] : memref<1x1xf32, #tpu.memory_space<smem>>
      memref.store %cst_18, %arg4[%c0_19, %c0_20] : memref<1x1xf32, #tpu.memory_space<smem>>
    } else {
    }
    %c0 = arith.constant 0 : index
    %c0_1 = arith.constant 0 : index
    %3 = vector.load %arg2[%c0, %c0_1] : memref<7x128xf32, #tpu.memory_space<vmem>>, vector<7x128xf32>
    %c0_2 = arith.constant 0 : index
    %c0_3 = arith.constant 0 : index
    %4 = vector.load %arg3[%c0_2, %c0_3] : memref<1x128xi32, #tpu.memory_space<vmem>>, vector<1x128xi32>
    %cst = arith.constant dense<0xFF800000> : vector<128xf32>
    %5 = vector.multi_reduction <maximumf>, %3, %cst [0] : vector<7x128xf32> to vector<128xf32>
    %6 = vector.shape_cast %5 : vector<128xf32> to vector<1x128xf32>
    %7 = vector.broadcast %6 : vector<1x128xf32> to vector<7x128xf32>
    %8 = arith.subf %3, %7 : vector<7x128xf32>
    %9 = math.exp %8 : vector<7x128xf32>
    %cst_4 = arith.constant dense<0.000000e+00> : vector<128xf32>
    %10 = vector.multi_reduction <add>, %9, %cst_4 [0] : vector<7x128xf32> to vector<128xf32>
    %11 = vector.shape_cast %10 : vector<128xf32> to vector<1x128xf32>
    %12 = math.log %11 : vector<1x128xf32>
    %13 = tpu.iota {dimensions = array<i32: 0>} : vector<7x128xi32>
    %14 = vector.broadcast %4 : vector<1x128xi32> to vector<7x128xi32>
    %15 = arith.cmpi eq, %13, %14 : vector<7x128xi32>
    %cst_5 = arith.constant 0.000000e+00 : f32
    %16 = vector.broadcast %cst_5 : f32 to vector<7x128xf32>
    %17 = arith.select %15, %8, %16 : vector<7x128xi1>, vector<7x128xf32>
    %cst_6 = arith.constant dense<0.000000e+00> : vector<128xf32>
    %18 = vector.multi_reduction <add>, %17, %cst_6 [0] : vector<7x128xf32> to vector<128xf32>
    %19 = vector.shape_cast %18 : vector<128xf32> to vector<1x128xf32>
    %20 = arith.subf %19, %12 : vector<1x128xf32>
    %cst_7 = arith.constant dense<0.000000e+00> : vector<128xf32>
    %21 = vector.multi_reduction <add>, %8, %cst_7 [0] : vector<7x128xf32> to vector<128xf32>
    %22 = vector.shape_cast %21 : vector<128xf32> to vector<1x128xf32>
    %cst_8 = arith.constant 7.000000e+00 : f32
    %23 = vector.broadcast %cst_8 : f32 to vector<1x128xf32>
    %24 = arith.mulf %23, %12 : vector<1x128xf32>
    %25 = arith.subf %22, %24 : vector<1x128xf32>
    %cst_9 = arith.constant 0.883333325 : f32
    %26 = vector.broadcast %cst_9 : f32 to vector<1x128xf32>
    %27 = arith.mulf %26, %20 : vector<1x128xf32>
    %cst_10 = arith.constant 0.0166666675 : f32
    %28 = vector.broadcast %cst_10 : f32 to vector<1x128xf32>
    %29 = arith.mulf %28, %25 : vector<1x128xf32>
    %30 = arith.addf %27, %29 : vector<1x128xf32>
    %cst_11 = arith.constant 0.000000e+00 : f32
    %31 = vector.broadcast %cst_11 : f32 to vector<1x128xf32>
    %32 = arith.subf %31, %30 : vector<1x128xf32>
    %c1_i32 = arith.constant 1 : i32
    %33 = arith.muli %arg0, %c1_i32 : i32
    %34 = arith.addi %33, %arg1 : i32
    %c128_i32 = arith.constant 128 : i32
    %35 = arith.muli %34, %c128_i32 : i32
    %36 = tpu.iota {dimensions = array<i32: 1>} : vector<1x128xi32>
    %37 = vector.broadcast %35 : i32 to vector<1x128xi32>
    %38 = arith.addi %37, %36 : vector<1x128xi32>
    %c8_i32 = arith.constant 8 : i32
    %39 = vector.broadcast %c8_i32 : i32 to vector<1x128xi32>
    %40 = arith.cmpi slt, %38, %39 : vector<1x128xi32>
    %cst_12 = arith.constant 0.000000e+00 : f32
    %41 = vector.broadcast %cst_12 : f32 to vector<1x128xf32>
    %42 = arith.select %40, %32, %41 : vector<1x128xi1>, vector<1x128xf32>
    %c0_13 = arith.constant 0 : index
    %c0_14 = arith.constant 0 : index
    %43 = memref.load %arg4[%c0_13, %c0_14] : memref<1x1xf32, #tpu.memory_space<smem>>
    %44 = vector.shape_cast %42 : vector<1x128xf32> to vector<1x1x128xf32>
    %cst_15 = arith.constant dense<0.000000e+00> : vector<1xf32>
    %45 = vector.multi_reduction <add>, %44, %cst_15 [1, 2] : vector<1x1x128xf32> to vector<1xf32>
    %46 = vector.shape_cast %45 : vector<1xf32> to vector<1x1x1xf32>
    %47 = vector.extract %46[0, 0, 0] : f32 from vector<1x1x1xf32>
    %48 = arith.addf %43, %47 : f32
    %c0_16 = arith.constant 0 : index
    %c0_17 = arith.constant 0 : index
    %49 = memref.load %arg4[%c0_16, %c0_17] : memref<1x1xf32, #tpu.memory_space<smem>>
    memref.store %48, %arg4[%c0_16, %c0_17] : memref<1x1xf32, #tpu.memory_space<smem>>
    return
  }
  func.func @transform_0(%arg0: i32, %arg1: i32) -> (i32, i32) {
    %c1_i32 = arith.constant 1 : i32
    %0 = arith.muli %arg0, %c1_i32 : i32
    %1 = arith.addi %0, %arg1 : i32
    %c0_i32 = arith.constant 0 : i32
    %c0_i32_0 = arith.constant 0 : i32
    return %c0_i32, %1 : i32, i32
  }
  func.func @transform_1(%arg0: i32, %arg1: i32) -> (i32, i32) {
    %c1_i32 = arith.constant 1 : i32
    %0 = arith.muli %arg0, %c1_i32 : i32
    %1 = arith.addi %0, %arg1 : i32
    %c0_i32 = arith.constant 0 : i32
    %c0_i32_0 = arith.constant 0 : i32
    return %c0_i32, %1 : i32, i32
  }
  func.func @transform_2(%arg0: i32, %arg1: i32) -> (i32, i32) {
    %c0_i32 = arith.constant 0 : i32
    %c0_i32_0 = arith.constant 0 : i32
    return %arg0, %c0_i32 : i32, i32
  }
}

</mosaic_0001>

<llo_original>
// kernel: tpu_custom_call.1
$region0: #{tpu_custom_call.1}
  #allocation0 [shape = 'u32[]', space=smem, size = 0x4, offset = 0x4, fixed_abs, tag = 'smem constant byte address 0x4 - core index']
  #allocation1 [shape = 'u32[144,128]{1,0:T(1,128)}', space=vmem, size = 0x12000, scoped, tag = 'internal scratch']
  %s0 = inlined_call_operand.hbm [shape: f32[7,128], index: 0, kind: input, shape index: {}]
  %s1 = inlined_call_operand.vmem [shape: s32[1,128], index: 1, kind: input, shape index: {}]
  %s2 = inlined_call_operand.hbm [shape: f32[1,1], index: 2, kind: output, shape index: {}]
  %s3 = sld [smem:[#allocation0]]
  $region26: #{tpu_custom_call.1} parent=0
    _
  %s5 = ssub.s32 1, %s3
  %s6 = scalar_select 0, %s5, %s3
  $region1: #{tpu_custom_call.1} parent=0
    #allocation2 [shape = 'u8[4096]{0}', space=vmem, size = 0x1000, scoped, tag = 'input window, operand 0, single buffered']
    #allocation3 [shape = 's32[1]{0}', space=sflag, size = 0x4, scoped, tag = 'scoped memory for tpu_custom_call.1']
    #allocation4 [shape = 's32[1]{0}', space=sflag, size = 0x4, scoped, tag = 'scoped memory for tpu_custom_call.1']
    #allocation5 [shape = 'u8[512]{0}', space=smem, size = 0x200, scoped, tag = 'output window, operand 0, single buffered']
    %7 = vsyncpa [#allocation3], 0
    %8 = vsyncpa [#allocation4], 0
    // Predicated region
    $region2: #{tpu_custom_call.1} parent=1 // pred_check
      _
    $region3: #{tpu_custom_call.1} parent=1 // pred_check_branch
      %10 = sbr.rel (0) target = $region5
    $region4: #{tpu_custom_call.1} parent=1 // pred_region
      %s11 = sadd.s32 0, 0
      %s13 = ssub.s32 128, 128
      %14 = vsyncadd [#allocation3], %s13
      %s15 = smul.addr %s11, 128
      %s16 = scalar_lea.hbm %s0, %s15
      %s18 = sshll.u32 [#allocation2], 4
      %s19 = int_to_ptr.vmem [resolvable:$true] %s18
      %21 = dma.hbm_to_vmem [thread:$0]  %s16, 128, %s19, [#allocation3]
    $region5: #{tpu_custom_call.1} parent=1 // pred_fallthru
      _
    // Predicated region
    $region6: #{tpu_custom_call.1} parent=1 // pred_check
      _
    $region7: #{tpu_custom_call.1} parent=1 // pred_check_branch
      %23 = sbr.rel (0) target = $region9
    $region8: #{tpu_custom_call.1} parent=1 // pred_region
      %s24 = sadd.s32 0, 0
      %p25 = scmp.lt.s32.totalorder %s24, 0
      %s26 = scalar_select %p25, %s24, 0
      %s27 = scalar_lea.vmem %s1, %s26
      %s28 = sadd.s32 0, 0
    $region9: #{tpu_custom_call.1} parent=1 // pred_fallthru
      _
    // Predicated region
    $region10: #{tpu_custom_call.1} parent=1 // pred_check
      _
    $region11: #{tpu_custom_call.1} parent=1 // pred_check_branch
      %30 = sbr.rel (0) target = $region13
    $region12: #{tpu_custom_call.1} parent=1 // pred_region
      %31 = dma.done [#allocation3], 128
    $region13: #{tpu_custom_call.1} parent=1 // pred_fallthru
      _
    %s32 = sadd.s32 0, 0
    %p33 = scmp.lt.s32.totalorder %s32, 0
    %s34 = scalar_select %p33, %s32, 0
    %s35 = scalar_lea.vmem %s1, %s34
    %s36 = sadd.s32 0, 0
    %s37 = sadd.s32 0, 0
    %p38 = scmp.lt.s32.totalorder %s37, 0
    %s39 = scalar_select %p38, %s37, 0
    %s40 = scalar_lea.vmem %s1, %s39
    %s41 = sadd.s32 0, 0
    %p42 = scmp.eq.s32.totalorder 0, 0
    // Predicated region
    $region14: #{tpu_custom_call.1} parent=1 // pred_check
      %p43 = pneg %p42
    $region15: #{tpu_custom_call.1} parent=1 // pred_check_branch
      %45 = sbr.rel (%p43) target = $region17
    $region16: #{tpu_custom_call.1} parent=1 // pred_region
      %s46 = scalar_lea.smem [#allocation5], 0
      %47 = sst [smem:[%s46]] 0.0
    $region17: #{tpu_custom_call.1} parent=1 // pred_fallthru
      _
    %v48 = vld [vmem:[#allocation2] sm:$0x7f]
    %v49 = vld [vmem:[%s40] sm:$0x1]
    %vm50 = vcmask 1046528
    %v51 = vsel %vm50, %v48, -inf
    %v52 = vrot.slane %v51, 4
    %v53 = vmax.f32 %v51, %v52
    %v54 = vrot.slane %v53, 2
    %v55 = vmax.f32 %v53, %v54
    %v56 = vrot.slane %v55, 1
    %v57 = vmax.f32 %v55, %v56
    %v58 = vsub.f32 %v48, %v57
    %v59 = vmul.f32 %v58, 1.442695
    %v60 = vpow.pop %v59
    %v61 = vsel %vm50, %v60, 0.0
    %v62 = vrot.slane %v61, 4
    %v63 = vadd.f32 %v61, %v62
    %v64 = vrot.slane %v63, 2
    %v65 = vadd.f32 %v63, %v64
    %v66 = vrot.slane %v65, 1
    %v67 = vadd.f32 %v65, %v66
    %v68 = vlog2.pop %v67
    %v69 = vmul.f32 %v68, 0.6931472
    %v70 = vlaneseq
    %v71 = vshrl.u32 %v70, 7
    %v72 = vlaneseq
    %v73 = vshrl.u32 %v72, 7
    %v74 = vsub.s32 0, %v73
    %v75 = vrot.slane %v49, %v74
    %vm76 = vcmp.eq.s32.totalorder %v71, %v75
    %v77 = vsel %vm76, %v58, 0.0
    %v78 = vsel %vm50, %v77, 0.0
    %v79 = vrot.slane %v78, 4
    %v80 = vadd.f32 %v78, %v79
    %v81 = vrot.slane %v80, 2
    %v82 = vadd.f32 %v80, %v81
    %v83 = vrot.slane %v82, 1
    %v84 = vadd.f32 %v82, %v83
    %v85 = vsub.f32 %v84, %v69
    %v86 = vsel %vm50, %v58, 0.0
    %v87 = vrot.slane %v86, 4
    %v88 = vadd.f32 %v86, %v87
    %v89 = vrot.slane %v88, 2
    %v90 = vadd.f32 %v88, %v89
    %v91 = vrot.slane %v90, 1
    %v92 = vadd.f32 %v90, %v91
    %v93 = vmul.f32 %v69, 7.0
    %v94 = vsub.f32 %v92, %v93
    %v95 = vmul.f32 %v85, 0.8833333
    %v96 = vmul.f32 %v94, 0.016666668
    %v97 = vadd.f32 %v95, %v96
    %v98 = vsub.f32 0.0, %v97
    %s99 = sadd.s32 0, 0
    %s100 = smul.u32 %s99, 128
    %v101 = vlaneseq
    %v102 = vand.u32 %v101, 127
    %v103 = vstv %s100
    %v104 = vadd.s32 %v103, %v102
    %vm105 = vcmp.lt.s32.totalorder %v104, 8
    %v106 = vsel %vm105, %v98, 0.0
    %s107 = sld [smem:[#allocation5]]
    %vm108 = vcmask 1040384
    %v109 = vsel %vm108, %v106, 0.0
    %110 = vadd.xlane.f32.xlu0 %v109
    %v111 = vpop.xlane.xlu0 %110
    %v112 = vrot.slane %v111, 4
    %v113 = vadd.f32 %v111, %v112
    %v114 = vrot.slane %v113, 2
    %v115 = vadd.f32 %v113, %v114
    %v116 = vrot.slane %v115, 1
    %v117 = vadd.f32 %v115, %v116
    %s118 = vtos %v117
    %s119 = sadd.f32 %s107, %s118
    %s120 = scalar_lea.smem [#allocation5], 0
    %121 = sst [smem:[%s120]] %s119
    // Predicated region
    $region18: #{tpu_custom_call.1} parent=1 // pred_check
      _
    $region19: #{tpu_custom_call.1} parent=1 // pred_check_branch
      %123 = sbr.rel (0) target = $region21
    $region20: #{tpu_custom_call.1} parent=1 // pred_region
      %s125 = ssub.s32 16, 16
      %126 = vsyncadd [#allocation4], %s125
      %129 = dma.smem_to_hbm [#allocation5], 16, %s2, [#allocation4]
    $region21: #{tpu_custom_call.1} parent=1 // pred_fallthru
      _
    // Predicated region
    $region22: #{tpu_custom_call.1} parent=1 // pred_check
      _
    $region23: #{tpu_custom_call.1} parent=1 // pred_check_branch
      %131 = sbr.rel (0) target = $region25
    $region24: #{tpu_custom_call.1} parent=1 // pred_region
      %132 = dma.done [#allocation4], 16
    $region25: #{tpu_custom_call.1} parent=1 // pred_fallthru
      _
    %133 = sfence
    %134 = vsyncpa [#allocation3], 1
    %135 = vsyncpa [#allocation4], 1

</llo_original>
